<compile_context>
chip_gen: v6e
topology: v6e:2x2x1
jax: 0.10.0
libtpu: 0.0.40
codegen_flags: <defaults>
</compile_context>

<pallas_src>
import functools

import jax
import jax.numpy as jnp
from jax.experimental import pallas as pl
from jax.experimental.pallas import tpu as pltpu


_TILE_BYTES = 4 << 20          # ~4 MiB of input per operand per tile
_VMEM_LIMIT_BYTES = 32 << 20   # raise v5e's 16 MiB scoped default; <= v7x 64 MiB physical


def _mse_partial_kernel(p_ref, t_ref, o_ref, acc_ref, *,
                        tm, g_inner, m_rows, need_mask, acc_rows):
    c = pl.program_id(0)   # parallel row-chunk axis (megacore on v7x)
    i = pl.program_id(1)   # arbitrary row reduction axis
    j = pl.program_id(2)   # arbitrary lane (N-chunk) reduction axis
    ni = pl.num_programs(1)
    nj = pl.num_programs(2)

    @pl.when((i == 0) & (j == 0))
    def _():
        acc_ref[...] = jnp.zeros_like(acc_ref)

    d = p_ref[...].astype(jnp.float32) - t_ref[...].astype(jnp.float32)
    sq = d * d

    groups = tm // acc_rows

    def block_sum(x):
        # Vreg-resident partial reduction down to (acc_rows, tn); sublane-aligned
        # reshape (tm multiple of 8), pure VALU adds.
        if groups == 1:
            return x
        return x.reshape(groups, acc_rows, x.shape[-1]).sum(axis=0)

    if need_mask:
        # Only the tail / overshoot row blocks pay for the iota+compare+select;
        # the steady state takes the unmasked branch.
        row0 = (c * g_inner + i) * tm          # logical (unclamped) row offset
        is_full = row0 + tm <= m_rows

        @pl.when(is_full)
        def _():
            acc_ref[...] += block_sum(sq)

        @pl.when(jnp.logical_not(is_full))
        def _():
            rows = row0 + jax.lax.broadcasted_iota(jnp.int32, (tm, 1), 0)
            # Mask applied AFTER squaring: discards garbage from padded /
            # duplicated (overshoot) rows, including any NaN/Inf.
            acc_ref[...] += block_sum(jnp.where(rows < m_rows, sq, jnp.float32(0.0)))
    else:
        acc_ref[...] += block_sum(sq)

    @pl.when((i == ni - 1) & (j == nj - 1))
    def _():
        o_ref[...] = jnp.sum(acc_ref[...]).reshape(1, 1)


def _choose_tn(n, itemsize, tile_bytes):
    """Lane tile: full N if it fits (or can't be tiled), else the largest
    128-multiple divisor of N such that 8 rows stay within the tile budget."""
    if n % 128 != 0 or 8 * n * itemsize <= tile_bytes:
        return n
    max_tn = max(128, ((tile_bytes // (8 * itemsize)) // 128) * 128)
    tn = 128
    k = 256
    while k <= max_tn:
        if n % k == 0:
            tn = k
        k += 128
    return tn


def heatmap_loss(pred, target, *, min_pallas_elements=1 << 15,
                 tile_bytes=_TILE_BYTES):
    """MSE loss (mean reduction) over (B, L, N) heatmaps, matching nn.MSELoss()."""
    assert pred.shape == target.shape
    B, L, N = pred.shape
    M = B * L
    total_elems = M * N

    if total_elems < min_pallas_elements:
        # Small-problem shortcut: pallas_call launch + pipeline prologue would
        # dominate; plain XLA fusion is faster here.
        d = pred.astype(jnp.float32) - target.astype(jnp.float32)
        return jnp.mean(d * d).astype(pred.dtype)

    p2 = pred.reshape(M, N)
    t2 = target.reshape(M, N)

    itemsize = jnp.dtype(pred.dtype).itemsize

    # ---- lane (N) tiling -----------------------------------------------------
    tn = _choose_tn(N, itemsize, tile_bytes)
    g_col = N // tn

    # ---- row tiling: ~tile_bytes per operand, multiple of 8, <= M -------------
    # VMEM per step: 2 operands x 2 pipeline buffers x tile (~16 MiB worst case)
    # + (8, tn) f32 accumulator; fits the 32 MiB limit set below on all gens.
    desired_tm = tile_bytes // max(1, tn * itemsize)
    desired_tm = max(8, min(desired_tm, 4096))
    desired_tm = (desired_tm // 8) * 8
    if M >= 8:
        tm = max(8, min(desired_tm, (M // 8) * 8))   # multiple of 8, <= M
    else:
        tm = M                                       # full dim (allowed)
    acc_rows = 8 if tm % 8 == 0 else tm

    row_steps = pl.cdiv(M, tm)
    # Unconditional 2-way outer split (v7x megacore shards it across both TCs;
    # serial but harmless on v5e/v6e). Overshoot steps are clamped in the
    # index_map and fully zeroed by the row mask.
    g_outer = 2 if row_steps >= 2 else 1
    g_inner = pl.cdiv(row_steps, g_outer)
    need_mask = (g_outer * g_inner * tm) != M

    if need_mask:
        def row_block(c, i):
            return jnp.minimum(c * g_inner + i, row_steps - 1)
    else:
        def row_block(c, i):
            return c * g_inner + i

    in_spec = pl.BlockSpec((tm, tn), lambda c, i, j: (row_block(c, i), j))

    kernel = functools.partial(
        _mse_partial_kernel, tm=tm, g_inner=g_inner, m_rows=M,
        need_mask=need_mask, acc_rows=acc_rows)

    partials = pl.pallas_call(
        kernel,
        out_shape=jax.ShapeDtypeStruct((g_outer, 1), jnp.float32),
        grid_spec=pltpu.PrefetchScalarGridSpec(
            num_scalar_prefetch=0,
            grid=(g_outer, g_inner, g_col),
            in_specs=[in_spec, in_spec],
            out_specs=pl.BlockSpec((1, 1), lambda c, i, j: (c, 0)),
            scratch_shapes=[pltpu.VMEM((acc_rows, tn), jnp.float32)],
        ),
        compiler_params=pltpu.CompilerParams(
            dimension_semantics=("parallel", "arbitrary", "arbitrary"),
            vmem_limit_bytes=_VMEM_LIMIT_BYTES,
        ),
    )(p2, t2)

    mean = jnp.sum(partials) / jnp.float32(total_elems)
    return mean.astype(pred.dtype)


if __name__ == "__main__":
    key = jax.random.PRNGKey(0)
    k1, k2 = jax.random.split(key)

    # Case 1: shapes implied by the module's forward (B, L, N); force the
    # Pallas path so the kernel itself is exercised on this small test shape.
    B, L, N = 2, 8, 128
    pred = jax.random.normal(k1, (B, L, N), dtype=jnp.float32)
    target = jax.random.normal(k2, (B, L, N), dtype=jnp.float32)
    loss = heatmap_loss(pred, target, min_pallas_elements=0)
    jax.block_until_ready(loss)
    ref = jnp.mean((pred - target) ** 2)
    assert jnp.allclose(loss, ref, rtol=1e-5, atol=1e-6), (loss, ref)

    # Case 2: row count not divisible by the tile -> masked tail block plus the
    # unconditional 2-way outer split.
    k3, k4 = jax.random.split(k2)
    pred2 = jax.random.normal(k3, (3, 7, 128), dtype=jnp.float32)
    target2 = jax.random.normal(k4, (3, 7, 128), dtype=jnp.float32)
    loss2 = heatmap_loss(pred2, target2, min_pallas_elements=0)
    jax.block_until_ready(loss2)
    ref2 = jnp.mean((pred2 - target2) ** 2)
    assert jnp.allclose(loss2, ref2, rtol=1e-5, atol=1e-6), (loss2, ref2)

    # Case 3: tiny tile budget forces the lane (N) tiling path and an odd row
    # step count (overshoot block clamped + fully masked).
    k5, k6 = jax.random.split(k4)
    pred3 = jax.random.normal(k5, (3, 8, 256), dtype=jnp.float32)
    target3 = jax.random.normal(k6, (3, 8, 256), dtype=jnp.float32)
    loss3 = heatmap_loss(pred3, target3, min_pallas_elements=0, tile_bytes=4096)
    jax.block_until_ready(loss3)
    ref3 = jnp.mean((pred3 - target3) ** 2)
    assert jnp.allclose(loss3, ref3, rtol=1e-5, atol=1e-6), (loss3, ref3)

    # Case 4: default dispatch (small-shape XLA shortcut) still matches.
    loss4 = heatmap_loss(pred, target)
    jax.block_until_ready(loss4)
    assert jnp.allclose(loss4, ref, rtol=1e-5, atol=1e-6), (loss4, ref)

    print("KERNEL_OK")
</pallas_src>

<mosaic_0001>
module attributes {stable_mosaic.version = 11 : i64} {
  func.func @_mse_partial_kernel(%arg0: i32, %arg1: i32, %arg2: i32, %arg3: memref<16x128xf32, #tpu.memory_space<vmem>>, %arg4: memref<16x128xf32, #tpu.memory_space<vmem>>, %arg5: memref<1x1xf32, #tpu.memory_space<vmem>>, %arg6: memref<8x128xf32, #tpu.memory_space<vmem>>) attributes {dimension_semantics = [#tpu.dimension_semantics<parallel>, #tpu.dimension_semantics<arbitrary>, #tpu.dimension_semantics<arbitrary>], iteration_bounds = array<i64: 1, 1, 1>, scalar_prefetch = 0 : i64, scratch_operands = 1 : i64, tpu.core_type = #tpu.core_type<tc>, window_params = [{transform_indices = @transform_0, window_bounds = array<i64: 16, 128>}, {transform_indices = @transform_1, window_bounds = array<i64: 16, 128>}, {transform_indices = @transform_2, window_bounds = array<i64: 1, 1>}]} {
    %c0_i32 = arith.constant 0 : i32
    %0 = arith.cmpi eq, %arg1, %c0_i32 : i32
    %c0_i32_0 = arith.constant 0 : i32
    %1 = arith.cmpi eq, %arg2, %c0_i32_0 : i32
    %2 = arith.andi %0, %1 : i1
    %3 = arith.extui %2 : i1 to i32
    %c0_i32_1 = arith.constant 0 : i32
    %4 = arith.cmpi ne, %3, %c0_i32_1 : i32
    scf.if %4 {
      %cst_12 = arith.constant 0.000000e+00 : f32
      %19 = vector.broadcast %cst_12 : f32 to vector<8x128xf32>
      %c0_13 = arith.constant 0 : index
      %c0_14 = arith.constant 0 : index
      %20 = vector.load %arg6[%c0_13, %c0_14] : memref<8x128xf32, #tpu.memory_space<vmem>>, vector<8x128xf32>
      tpu.vector_store %arg6[%c0_13, %c0_14], %19 {strides = array<i32>} : memref<8x128xf32, #tpu.memory_space<vmem>>, vector<8x128xf32>,
    } else {
    }
    %c0 = arith.constant 0 : index
    %c0_2 = arith.constant 0 : index
    %5 = vector.load %arg3[%c0, %c0_2] : memref<16x128xf32, #tpu.memory_space<vmem>>, vector<16x128xf32>
    %c0_3 = arith.constant 0 : index
    %c0_4 = arith.constant 0 : index
    %6 = vector.load %arg4[%c0_3, %c0_4] : memref<16x128xf32, #tpu.memory_space<vmem>>, vector<16x128xf32>
    %7 = arith.subf %5, %6 : vector<16x128xf32>
    %8 = arith.mulf %7, %7 : vector<16x128xf32>
    %c0_5 = arith.constant 0 : index
    %c0_6 = arith.constant 0 : index
    %9 = vector.load %arg6[%c0_5, %c0_6] : memref<8x128xf32, #tpu.memory_space<vmem>>, vector<8x128xf32>
    %10 = vector.shape_cast %8 : vector<16x128xf32> to vector<2x8x128xf32>
    %cst = arith.constant dense<0.000000e+00> : vector<8x128xf32>
    %11 = vector.multi_reduction <add>, %10, %cst [0] : vector<2x8x128xf32> to vector<8x128xf32>
    %12 = arith.addf %9, %11 : vector<8x128xf32>
    %c0_7 = arith.constant 0 : index
    %c0_8 = arith.constant 0 : index
    %13 = vector.load %arg6[%c0_7, %c0_8] : memref<8x128xf32, #tpu.memory_space<vmem>>, vector<8x128xf32>
    tpu.vector_store %arg6[%c0_7, %c0_8], %12 {strides = array<i32>} : memref<8x128xf32, #tpu.memory_space<vmem>>, vector<8x128xf32>,
    %c0_i32_9 = arith.constant 0 : i32
    %14 = arith.cmpi eq, %arg1, %c0_i32_9 : i32
    %c0_i32_10 = arith.constant 0 : i32
    %15 = arith.cmpi eq, %arg2, %c0_i32_10 : i32
    %16 = arith.andi %14, %15 : i1
    %17 = arith.extui %16 : i1 to i32
    %c0_i32_11 = arith.constant 0 : i32
    %18 = arith.cmpi ne, %17, %c0_i32_11 : i32
    scf.if %18 {
      %c0_12 = arith.constant 0 : index
      %c0_13 = arith.constant 0 : index
      %19 = vector.load %arg6[%c0_12, %c0_13] : memref<8x128xf32, #tpu.memory_space<vmem>>, vector<8x128xf32>
      %20 = vector.shape_cast %19 : vector<8x128xf32> to vector<1x8x128xf32>
      %cst_14 = arith.constant dense<0.000000e+00> : vector<1xf32>
      %21 = vector.multi_reduction <add>, %20, %cst_14 [1, 2] : vector<1x8x128xf32> to vector<1xf32>
      %22 = vector.shape_cast %21 : vector<1xf32> to vector<1x1x1xf32>
      %23 = vector.extract %22[0, 0, 0] : f32 from vector<1x1x1xf32>
      %24 = vector.broadcast %23 : f32 to vector<1x1xf32>
      %c0_15 = arith.constant 0 : index
      %c0_16 = arith.constant 0 : index
      %25 = vector.load %arg5[%c0_15, %c0_16] : memref<1x1xf32, #tpu.memory_space<vmem>>, vector<1x1xf32>
      tpu.vector_store %arg5[%c0_15, %c0_16], %24 {strides = array<i32>} : memref<1x1xf32, #tpu.memory_space<vmem>>, vector<1x1xf32>,
    } else {
    }
    return
  }
  func.func @transform_0(%arg0: i32, %arg1: i32, %arg2: i32) -> (i32, i32) {
    %c1_i32 = arith.constant 1 : i32
    %0 = arith.muli %arg0, %c1_i32 : i32
    %1 = arith.addi %0, %arg1 : i32
    %c0_i32 = arith.constant 0 : i32
    return %1, %arg2 : i32, i32
  }
  func.func @transform_1(%arg0: i32, %arg1: i32, %arg2: i32) -> (i32, i32) {
    %c1_i32 = arith.constant 1 : i32
    %0 = arith.muli %arg0, %c1_i32 : i32
    %1 = arith.addi %0, %arg1 : i32
    %c0_i32 = arith.constant 0 : i32
    return %1, %arg2 : i32, i32
  }
  func.func @transform_2(%arg0: i32, %arg1: i32, %arg2: i32) -> (i32, i32) {
    %c0_i32 = arith.constant 0 : i32
    %c0_i32_0 = arith.constant 0 : i32
    return %arg0, %c0_i32 : i32, i32
  }
}

</mosaic_0001>

<llo_original>
// kernel: tpu_custom_call.1
$region0: #{tpu_custom_call.1}
  #allocation0 [shape = 'u32[]', space=smem, size = 0x4, offset = 0x4, fixed_abs, tag = 'smem constant byte address 0x4 - core index']
  #allocation1 [shape = 'u32[144,128]{1,0:T(1,128)}', space=vmem, size = 0x12000, scoped, tag = 'internal scratch']
  #allocation2 [shape = 'f32[8,128]{1,0:T(8,128)}', space=vmem, size = 0x1000, scoped, tag = 'scratch operand']
  %s0 = inlined_call_operand.hbm [shape: f32[16,128], index: 0, kind: input, shape index: {}]
  %s1 = inlined_call_operand.hbm [shape: f32[16,128], index: 1, kind: input, shape index: {}]
  %s2 = inlined_call_operand.hbm [shape: f32[1,1], index: 2, kind: output, shape index: {}]
  %s3 = sld [smem:[#allocation0]]
  $region34: #{tpu_custom_call.1} parent=0
    _
  %s5 = ssub.s32 1, %s3
  %s6 = scalar_select 0, %s5, %s3
  $region1: #{tpu_custom_call.1} parent=0
    #allocation3 [shape = 'u8[8192]{0}', space=vmem, size = 0x2000, scoped, tag = 'input window, operand 0, single buffered']
    #allocation4 [shape = 's32[1]{0}', space=sflag, size = 0x4, scoped, tag = 'scoped memory for tpu_custom_call.1']
    #allocation5 [shape = 's32[1]{0}', space=sflag, size = 0x4, scoped, tag = 'scoped memory for tpu_custom_call.1']
    #allocation6 [shape = 'u8[8192]{0}', space=vmem, size = 0x2000, scoped, tag = 'input window, operand 1, single buffered']
    #allocation7 [shape = 's32[1]{0}', space=sflag, size = 0x4, scoped, tag = 'scoped memory for tpu_custom_call.1']
    #allocation8 [shape = 'u8[512]{0}', space=vmem, size = 0x400, scoped, tag = 'output window, operand 0, single buffered']
    %7 = vsyncpa [#allocation4], 0
    %8 = vsyncpa [#allocation7], 0
    %9 = vsyncpa [#allocation5], 0
    // Predicated region
    $region2: #{tpu_custom_call.1} parent=1 // pred_check
      _
    $region3: #{tpu_custom_call.1} parent=1 // pred_check_branch
      %11 = sbr.rel (0) target = $region5
    $region4: #{tpu_custom_call.1} parent=1 // pred_region
      %s12 = sadd.s32 0, 0
      %s13 = smul.u32 2, %s12
      %s15 = ssub.s32 256, 256
      %16 = vsyncadd [#allocation4], %s15
      %s17 = smul.addr %s13, 128
      %s18 = scalar_lea.hbm %s0, %s17
      %s19 = sshll.u32 [#allocation3], 4
      %s20 = int_to_ptr.vmem [resolvable:$true] %s19
      %25 = dma.hbm_to_vmem [thread:$0]  %s18, 256, %s20, [#allocation4], 128, 128, 8
    $region5: #{tpu_custom_call.1} parent=1 // pred_fallthru
      _
    // Predicated region
    $region6: #{tpu_custom_call.1} parent=1 // pred_check
      _
    $region7: #{tpu_custom_call.1} parent=1 // pred_check_branch
      %27 = sbr.rel (0) target = $region9
    $region8: #{tpu_custom_call.1} parent=1 // pred_region
      %s28 = sadd.s32 0, 0
      %s29 = smul.u32 2, %s28
      %s31 = ssub.s32 256, 256
      %32 = vsyncadd [#allocation7], %s31
      %s33 = smul.addr %s29, 128
      %s34 = scalar_lea.hbm %s1, %s33
      %s35 = sshll.u32 [#allocation6], 4
      %s36 = int_to_ptr.vmem [resolvable:$true] %s35
      %41 = dma.hbm_to_vmem [thread:$0]  %s34, 256, %s36, [#allocation7], 128, 128, 8
    $region9: #{tpu_custom_call.1} parent=1 // pred_fallthru
      _
    // Predicated region
    $region10: #{tpu_custom_call.1} parent=1 // pred_check
      _
    $region11: #{tpu_custom_call.1} parent=1 // pred_check_branch
      %43 = sbr.rel (0) target = $region13
    $region12: #{tpu_custom_call.1} parent=1 // pred_region
      %44 = dma.done [#allocation4], 256
    $region13: #{tpu_custom_call.1} parent=1 // pred_fallthru
      _
    // Predicated region
    $region14: #{tpu_custom_call.1} parent=1 // pred_check
      _
    $region15: #{tpu_custom_call.1} parent=1 // pred_check_branch
      %46 = sbr.rel (0) target = $region17
    $region16: #{tpu_custom_call.1} parent=1 // pred_region
      %47 = dma.done [#allocation7], 256
    $region17: #{tpu_custom_call.1} parent=1 // pred_fallthru
      _
    %s48 = sadd.s32 0, 0
    %s49 = smul.u32 2, %s48
    %s50 = sadd.s32 0, 0
    %s51 = smul.u32 2, %s50
    %p52 = scmp.eq.s32.totalorder 0, 0
    %p53 = scmp.eq.s32.totalorder 0, 0
    %p54 = pnand %p52, %p53
    %p55 = pneg %p54
    // Predicated region
    $region18: #{tpu_custom_call.1} parent=1 // pred_check
      _
    $region19: #{tpu_custom_call.1} parent=1 // pred_check_branch
      %57 = sbr.rel (%p54) target = $region21
    $region20: #{tpu_custom_call.1} parent=1 // pred_region
      %58 = vst [vmem:[#allocation2] sm:$0xff] 0.0
    $region21: #{tpu_custom_call.1} parent=1 // pred_fallthru
      _
    %v59 = vld [vmem:[#allocation3] sm:$0xff]
    %v60 = vld [vmem:[#allocation3 + $0x8] sm:$0xff]
    %v61 = vld [vmem:[#allocation6] sm:$0xff]
    %v62 = vld [vmem:[#allocation6 + $0x8] sm:$0xff]
    %v63 = vsub.f32 %v59, %v61
    %v64 = vsub.f32 %v60, %v62
    %v65 = vmul.f32 %v63, %v63
    %v66 = vmul.f32 %v64, %v64
    %v67 = vld [vmem:[#allocation2] sm:$0xff]
    %v68 = vadd.f32 %v65, %v66
    %v69 = vadd.f32 %v67, %v68
    %70 = vst [vmem:[#allocation2] sm:$0xff] %v69
    // Predicated region
    $region22: #{tpu_custom_call.1} parent=1 // pred_check
      _
    $region23: #{tpu_custom_call.1} parent=1 // pred_check_branch
      %72 = sbr.rel (%p54) target = $region25
    $region24: #{tpu_custom_call.1} parent=1 // pred_region
      %v73 = vld [vmem:[#allocation2] sm:$0xff]
      %74 = vadd.xlane.f32.xlu0 %v73
      %v75 = vpop.xlane.xlu0 %74
      %v76 = vrot.slane %v75, 4
      %v77 = vadd.f32 %v75, %v76
      %v78 = vrot.slane %v77, 2
      %v79 = vadd.f32 %v77, %v78
      %v80 = vrot.slane %v79, 1
      %v81 = vadd.f32 %v79, %v80
      %s82 = vtos %v81
      %v83 = vstv %s82
      %vm84 = vcmask 0
      %85 = vst.msk [vmem:[#allocation8] sm:$0x1] %vm84, %v83
    $region25: #{tpu_custom_call.1} parent=1 // pred_fallthru
      _
    // Predicated region
    $region26: #{tpu_custom_call.1} parent=1 // pred_check
      _
    $region27: #{tpu_custom_call.1} parent=1 // pred_check_branch
      %87 = sbr.rel (0) target = $region29
    $region28: #{tpu_custom_call.1} parent=1 // pred_region
      %s89 = ssub.s32 16, 16
      %90 = vsyncadd [#allocation5], %s89
      %s92 = sshll.u32 [#allocation8], 4
      %s93 = int_to_ptr.vmem [resolvable:$true] %s92
      %95 = dma.vmem_to_hbm [thread:$0]  %s93, 16, %s2, [#allocation5]
    $region29: #{tpu_custom_call.1} parent=1 // pred_fallthru
      _
    // Predicated region
    $region30: #{tpu_custom_call.1} parent=1 // pred_check
      _
    $region31: #{tpu_custom_call.1} parent=1 // pred_check_branch
      %97 = sbr.rel (0) target = $region33
    $region32: #{tpu_custom_call.1} parent=1 // pred_region
      %98 = dma.done [#allocation5], 16
    $region33: #{tpu_custom_call.1} parent=1 // pred_fallthru
      _
    %99 = vsyncpa [#allocation4], 1
    %100 = vsyncpa [#allocation7], 1
    %101 = vsyncpa [#allocation5], 1

</llo_original>
